<compile_context>
chip_gen: v7x
topology: tpu7x:2x2x1
jax: 0.10.0
libtpu: 0.0.40
codegen_flags: <defaults>
</compile_context>

<pallas_src>
import jax
import jax.numpy as jnp
from jax.experimental import pallas as pl
from jax.experimental.pallas import tpu as pltpu


def _make_encoder_kernel(num_layers, input_dim, hidden_dim):
    """Fused kernel: all GRU layers for a single (seq=1, batch=1) step, h0 == 0.

    With h0 == 0 the PyTorch GRU cell reduces to:
        r  = sigmoid(x W_ir^T + (b_ir + b_hr))
        z  = sigmoid(x W_iz^T + (b_iz + b_hz))
        n  = tanh   (x W_in^T + b_in + r * b_hn)
        h' = (1 - z) * n
    """
    H = hidden_dim

    def kernel(x_ref, w_ref, b_ref, hid_ref):
        # x_ref:   (1, input_dim)      f32
        # w_ref:   (L, in_max, 3H)     bf16, gates lane-packed [r | z | n]
        # b_ref:   (L, 4, H)           f32, rows [b_r, b_z, b_in, b_hn]
        # hid_ref: (L, 1, H)           f32
        x = x_ref[...].astype(jnp.bfloat16)          # (1, in_dim) bf16 into MXU
        in_dim = input_dim
        for layer in range(num_layers):
            w = w_ref[layer, 0:in_dim, :]            # (in_dim, 3H) bf16, static slice
            # Single fused matmul per layer; f32 accumulation on the MXU.
            g = jnp.dot(x, w, preferred_element_type=jnp.float32)   # (1, 3H) f32
            b = b_ref[layer]                          # (4, H) f32

            # Static lane-offset slices of g; all elementwise math in f32.
            r = jax.nn.sigmoid(g[:, 0:H] + b[0:1, :])
            z = jax.nn.sigmoid(g[:, H:2 * H] + b[1:2, :])
            n = jnp.tanh(g[:, 2 * H:3 * H] + b[2:3, :] + r * b[3:4, :])
            h = (1.0 - z) * n                         # h0 == 0  =>  z * h0 == 0

            hid_ref[layer] = h                        # this layer's final hidden (f32)
            x = h.astype(jnp.bfloat16)                # next layer's input (seq_len == 1)
            in_dim = H

    return kernel


@jax.jit
def encoder_forward(src, w_all, b_all):
    """Equivalent of Encoder.forward: GRU over src.view(1, 1, -1), zero init hidden."""
    x = src.reshape(1, -1).astype(jnp.float32)        # (1, input_dim)
    num_layers, _, three_h = w_all.shape
    hidden_dim = three_h // 3
    input_dim = x.shape[1]

    vmem = pl.BlockSpec(memory_space=pltpu.MemorySpace.VMEM)
    kernel = _make_encoder_kernel(num_layers, input_dim, hidden_dim)

    hidden = pl.pallas_call(
        kernel,
        out_shape=jax.ShapeDtypeStruct((num_layers, 1, hidden_dim), jnp.float32),
        in_specs=[vmem, vmem, vmem],
        out_specs=vmem,
    )(x, w_all, b_all)

    # outputs == hidden[-1] when seq_len == 1; build it outside the kernel so the
    # kernel writes a single output buffer.
    outputs = hidden[num_layers - 1][None]            # (1, 1, H)
    return outputs, hidden


def init_encoder_params(key, input_dim, hidden_dim, num_layers):
    """PyTorch-style GRU parameters, U(-1/sqrt(H), 1/sqrt(H)).

    Input weights are rounded through bf16 so the kernel's bf16 weight storage
    is numerically lossless w.r.t. the f32 reference.
    """
    bound = 1.0 / jnp.sqrt(jnp.float32(hidden_dim))
    params = []
    for layer in range(num_layers):
        in_dim = input_dim if layer == 0 else hidden_dim
        key, k1, k2, k3, k4 = jax.random.split(key, 5)
        w_ih = jax.random.uniform(k1, (3 * hidden_dim, in_dim), jnp.float32, -bound, bound)
        w_hh = jax.random.uniform(k2, (3 * hidden_dim, hidden_dim), jnp.float32, -bound, bound)
        b_ih = jax.random.uniform(k3, (3 * hidden_dim,), jnp.float32, -bound, bound)
        b_hh = jax.random.uniform(k4, (3 * hidden_dim,), jnp.float32, -bound, bound)
        w_ih = w_ih.astype(jnp.bfloat16).astype(jnp.float32)  # bf16-representable
        params.append((w_ih, w_hh, b_ih, b_hh))
    return params


def pack_encoder_params(params, input_dim, hidden_dim):
    """Host-side packing into the fused kernel's operand layout.

    - Weights: one (L, in_max, 3H) bf16 stack; each layer's w_ih^T lane-packs the
      three gates [r | z | n] so the kernel does one matmul per layer. Layers whose
      in_dim < in_max are zero-padded on the (unused) row axis.
    - Biases: one (L, 4, H) f32 stack [b_ir+b_hr, b_iz+b_hz, b_in, b_hn]
      (W_hh is never needed because h0 == 0).
    """
    H = hidden_dim
    in_max = max(input_dim, H)
    w_list, b_list = [], []
    for (w_ih, w_hh, b_ih, b_hh) in params:
        del w_hh  # unused with zero initial hidden state
        in_dim = w_ih.shape[1]
        w = w_ih.T                                      # (in_dim, 3H), gates along lanes
        if in_dim < in_max:
            w = jnp.pad(w, ((0, in_max - in_dim), (0, 0)))
        w_list.append(w.astype(jnp.bfloat16))
        b_r = b_ih[0:H] + b_hh[0:H]
        b_z = b_ih[H:2 * H] + b_hh[H:2 * H]
        b_in_ = b_ih[2 * H:3 * H]
        b_hn = b_hh[2 * H:3 * H]
        b_list.append(jnp.stack([b_r, b_z, b_in_, b_hn], axis=0))
    w_all = jnp.stack(w_list, axis=0)                   # (L, in_max, 3H) bf16
    b_all = jnp.stack(b_list, axis=0).astype(jnp.float32)  # (L, 4, H) f32
    return w_all, b_all


def _reference_forward(src, params, hidden_dim, num_layers):
    """Pure-JAX full-GRU reference (keeps the h @ W_hh term even though h0 == 0)."""
    H = hidden_dim
    x = src.reshape(1, -1).astype(jnp.float32)
    hs = []
    for layer in range(num_layers):
        w_ih, w_hh, b_ih, b_hh = params[layer]
        h = jnp.zeros((1, H), jnp.float32)
        gi = x @ w_ih.T + b_ih
        gh = h @ w_hh.T + b_hh
        r = jax.nn.sigmoid(gi[:, 0:H] + gh[:, 0:H])
        z = jax.nn.sigmoid(gi[:, H:2 * H] + gh[:, H:2 * H])
        n = jnp.tanh(gi[:, 2 * H:3 * H] + r * gh[:, 2 * H:3 * H])
        h = (1.0 - z) * n + z * h
        hs.append(h)
        x = h
    return x.reshape(1, 1, H), jnp.stack(hs, axis=0)


if __name__ == "__main__":
    INPUT_DIM = 32
    HIDDEN_DIM = 32
    NUM_LAYERS = 2

    key = jax.random.PRNGKey(0)
    key, src_key, param_key = jax.random.split(key, 3)

    # `src` can be any shape whose total size == input_dim (forward does .view(1,1,-1)).
    # Rounded through bf16 so the kernel's bf16 MXU path sees the exact same values.
    src = jax.random.normal(src_key, (8, 4), jnp.float32)  # 8*4 = 32 = input_dim
    src = src.astype(jnp.bfloat16).astype(jnp.float32)

    params = init_encoder_params(param_key, INPUT_DIM, HIDDEN_DIM, NUM_LAYERS)
    w_all, b_all = pack_encoder_params(params, INPUT_DIM, HIDDEN_DIM)

    outputs, hidden = encoder_forward(src, w_all, b_all)
    outputs = jax.block_until_ready(outputs)
    hidden = jax.block_until_ready(hidden)

    assert outputs.shape == (1, 1, HIDDEN_DIM)
    assert hidden.shape == (NUM_LAYERS, 1, HIDDEN_DIM)

    ref_out, ref_hid = _reference_forward(src, params, HIDDEN_DIM, NUM_LAYERS)
    # bf16 activations into the MXU -> bf16-appropriate tolerance vs the f32 reference.
    assert jnp.allclose(outputs, ref_out, atol=1e-2, rtol=1e-2), (
        float(jnp.max(jnp.abs(outputs - ref_out))))
    assert jnp.allclose(hidden, ref_hid, atol=1e-2, rtol=1e-2), (
        float(jnp.max(jnp.abs(hidden - ref_hid))))

    print("KERNEL_OK")
</pallas_src>

<mosaic_0001>
module attributes {stable_mosaic.version = 11 : i64} {
  func.func @kernel(%arg0: memref<1x32xf32, #tpu.memory_space<vmem>>, %arg1: memref<2x32x96xbf16, #tpu.memory_space<vmem>>, %arg2: memref<2x4x32xf32, #tpu.memory_space<vmem>>, %arg3: memref<2x1x32xf32, #tpu.memory_space<vmem>>) attributes {dimension_semantics = [], scalar_prefetch = 0 : i64, scratch_operands = 0 : i64, tpu.core_type = #tpu.core_type<tc>} {
    %c0 = arith.constant 0 : index
    %c0_0 = arith.constant 0 : index
    %0 = vector.load %arg0[%c0, %c0_0] : memref<1x32xf32, #tpu.memory_space<vmem>>, vector<1x32xf32>
    %1 = arith.truncf %0 : vector<1x32xf32> to vector<1x32xbf16>
    %c0_1 = arith.constant 0 : index
    %c0_2 = arith.constant 0 : index
    %c0_3 = arith.constant 0 : index
    %2 = vector.load %arg1[%c0_1, %c0_2, %c0_3] : memref<2x32x96xbf16, #tpu.memory_space<vmem>>, vector<1x32x96xbf16>
    %3 = vector.shape_cast %2 : vector<1x32x96xbf16> to vector<32x96xbf16>
    %cst = arith.constant dense<0.000000e+00> : vector<1x96xf32>
    %4 = tpu.matmul %1, %3, %cst {dimension_numbers = #tpu.dot_dimension_numbers<[1], [0], [0], [1], [0, 0, 1, 1], [], []>} : vector<1x32xbf16>, vector<32x96xbf16>, vector<1x96xf32> -> vector<1x96xf32>
    %c0_4 = arith.constant 0 : index
    %c0_5 = arith.constant 0 : index
    %c0_6 = arith.constant 0 : index
    %5 = vector.load %arg2[%c0_4, %c0_5, %c0_6] : memref<2x4x32xf32, #tpu.memory_space<vmem>>, vector<1x4x32xf32>
    %6 = vector.shape_cast %5 : vector<1x4x32xf32> to vector<4x32xf32>
    %7 = vector.extract_strided_slice %4 {offsets = [0, 0], sizes = [1, 32], strides = [1, 1]} : vector<1x96xf32> to vector<1x32xf32>
    %8 = vector.extract_strided_slice %6 {offsets = [0, 0], sizes = [1, 32], strides = [1, 1]} : vector<4x32xf32> to vector<1x32xf32>
    %9 = arith.addf %7, %8 : vector<1x32xf32>
    %10 = arith.negf %9 : vector<1x32xf32>
    %11 = math.exp %10 : vector<1x32xf32>
    %cst_7 = arith.constant 1.000000e+00 : f32
    %12 = vector.broadcast %cst_7 : f32 to vector<1x32xf32>
    %13 = arith.addf %12, %11 : vector<1x32xf32>
    %14 = arith.divf %12, %13 : vector<1x32xf32>
    %15 = vector.extract_strided_slice %4 {offsets = [0, 32], sizes = [1, 32], strides = [1, 1]} : vector<1x96xf32> to vector<1x32xf32>
    %16 = vector.extract_strided_slice %6 {offsets = [1, 0], sizes = [1, 32], strides = [1, 1]} : vector<4x32xf32> to vector<1x32xf32>
    %17 = arith.addf %15, %16 : vector<1x32xf32>
    %18 = arith.negf %17 : vector<1x32xf32>
    %19 = math.exp %18 : vector<1x32xf32>
    %cst_8 = arith.constant 1.000000e+00 : f32
    %20 = vector.broadcast %cst_8 : f32 to vector<1x32xf32>
    %21 = arith.addf %20, %19 : vector<1x32xf32>
    %22 = arith.divf %20, %21 : vector<1x32xf32>
    %23 = vector.extract_strided_slice %4 {offsets = [0, 64], sizes = [1, 32], strides = [1, 1]} : vector<1x96xf32> to vector<1x32xf32>
    %24 = vector.extract_strided_slice %6 {offsets = [2, 0], sizes = [1, 32], strides = [1, 1]} : vector<4x32xf32> to vector<1x32xf32>
    %25 = arith.addf %23, %24 : vector<1x32xf32>
    %26 = vector.extract_strided_slice %6 {offsets = [3, 0], sizes = [1, 32], strides = [1, 1]} : vector<4x32xf32> to vector<1x32xf32>
    %27 = arith.mulf %14, %26 : vector<1x32xf32>
    %28 = arith.addf %25, %27 : vector<1x32xf32>
    %29 = math.tanh %28 : vector<1x32xf32>
    %cst_9 = arith.constant 1.000000e+00 : f32
    %30 = vector.broadcast %cst_9 : f32 to vector<1x32xf32>
    %31 = arith.subf %30, %22 : vector<1x32xf32>
    %32 = arith.mulf %31, %29 : vector<1x32xf32>
    %c0_10 = arith.constant 0 : index
    %c0_11 = arith.constant 0 : index
    %c0_12 = arith.constant 0 : index
    %33 = vector.load %arg3[%c0_10, %c0_11, %c0_12] : memref<2x1x32xf32, #tpu.memory_space<vmem>>, vector<1x1x32xf32>
    %34 = vector.shape_cast %33 : vector<1x1x32xf32> to vector<1x32xf32>
    %35 = vector.shape_cast %32 : vector<1x32xf32> to vector<1x1x32xf32>
    tpu.vector_store %arg3[%c0_10, %c0_11, %c0_12], %35 {strides = array<i32>} : memref<2x1x32xf32, #tpu.memory_space<vmem>>, vector<1x1x32xf32>,
    %36 = arith.truncf %32 : vector<1x32xf32> to vector<1x32xbf16>
    %c1 = arith.constant 1 : index
    %c0_13 = arith.constant 0 : index
    %c0_14 = arith.constant 0 : index
    %37 = vector.load %arg1[%c1, %c0_13, %c0_14] : memref<2x32x96xbf16, #tpu.memory_space<vmem>>, vector<1x32x96xbf16>
    %38 = vector.shape_cast %37 : vector<1x32x96xbf16> to vector<32x96xbf16>
    %cst_15 = arith.constant dense<0.000000e+00> : vector<1x96xf32>
    %39 = tpu.matmul %36, %38, %cst_15 {dimension_numbers = #tpu.dot_dimension_numbers<[1], [0], [0], [1], [0, 0, 1, 1], [], []>} : vector<1x32xbf16>, vector<32x96xbf16>, vector<1x96xf32> -> vector<1x96xf32>
    %c1_16 = arith.constant 1 : index
    %c0_17 = arith.constant 0 : index
    %c0_18 = arith.constant 0 : index
    %40 = vector.load %arg2[%c1_16, %c0_17, %c0_18] : memref<2x4x32xf32, #tpu.memory_space<vmem>>, vector<1x4x32xf32>
    %41 = vector.shape_cast %40 : vector<1x4x32xf32> to vector<4x32xf32>
    %42 = vector.extract_strided_slice %39 {offsets = [0, 0], sizes = [1, 32], strides = [1, 1]} : vector<1x96xf32> to vector<1x32xf32>
    %43 = vector.extract_strided_slice %41 {offsets = [0, 0], sizes = [1, 32], strides = [1, 1]} : vector<4x32xf32> to vector<1x32xf32>
    %44 = arith.addf %42, %43 : vector<1x32xf32>
    %45 = arith.negf %44 : vector<1x32xf32>
    %46 = math.exp %45 : vector<1x32xf32>
    %cst_19 = arith.constant 1.000000e+00 : f32
    %47 = vector.broadcast %cst_19 : f32 to vector<1x32xf32>
    %48 = arith.addf %47, %46 : vector<1x32xf32>
    %49 = arith.divf %47, %48 : vector<1x32xf32>
    %50 = vector.extract_strided_slice %39 {offsets = [0, 32], sizes = [1, 32], strides = [1, 1]} : vector<1x96xf32> to vector<1x32xf32>
    %51 = vector.extract_strided_slice %41 {offsets = [1, 0], sizes = [1, 32], strides = [1, 1]} : vector<4x32xf32> to vector<1x32xf32>
    %52 = arith.addf %50, %51 : vector<1x32xf32>
    %53 = arith.negf %52 : vector<1x32xf32>
    %54 = math.exp %53 : vector<1x32xf32>
    %cst_20 = arith.constant 1.000000e+00 : f32
    %55 = vector.broadcast %cst_20 : f32 to vector<1x32xf32>
    %56 = arith.addf %55, %54 : vector<1x32xf32>
    %57 = arith.divf %55, %56 : vector<1x32xf32>
    %58 = vector.extract_strided_slice %39 {offsets = [0, 64], sizes = [1, 32], strides = [1, 1]} : vector<1x96xf32> to vector<1x32xf32>
    %59 = vector.extract_strided_slice %41 {offsets = [2, 0], sizes = [1, 32], strides = [1, 1]} : vector<4x32xf32> to vector<1x32xf32>
    %60 = arith.addf %58, %59 : vector<1x32xf32>
    %61 = vector.extract_strided_slice %41 {offsets = [3, 0], sizes = [1, 32], strides = [1, 1]} : vector<4x32xf32> to vector<1x32xf32>
    %62 = arith.mulf %49, %61 : vector<1x32xf32>
    %63 = arith.addf %60, %62 : vector<1x32xf32>
    %64 = math.tanh %63 : vector<1x32xf32>
    %cst_21 = arith.constant 1.000000e+00 : f32
    %65 = vector.broadcast %cst_21 : f32 to vector<1x32xf32>
    %66 = arith.subf %65, %57 : vector<1x32xf32>
    %67 = arith.mulf %66, %64 : vector<1x32xf32>
    %c1_22 = arith.constant 1 : index
    %c0_23 = arith.constant 0 : index
    %c0_24 = arith.constant 0 : index
    %68 = vector.load %arg3[%c1_22, %c0_23, %c0_24] : memref<2x1x32xf32, #tpu.memory_space<vmem>>, vector<1x1x32xf32>
    %69 = vector.shape_cast %68 : vector<1x1x32xf32> to vector<1x32xf32>
    %70 = vector.shape_cast %67 : vector<1x32xf32> to vector<1x1x32xf32>
    tpu.vector_store %arg3[%c1_22, %c0_23, %c0_24], %70 {strides = array<i32>} : memref<2x1x32xf32, #tpu.memory_space<vmem>>, vector<1x1x32xf32>,
    return
  }
}

</mosaic_0001>

<llo_original>
// kernel: encoder_forward.1
$region0: #{encoder_forward.1}
  #allocation0 [shape = 'u32[]', space=smem, size = 0x4, offset = 0x4, fixed_abs, tag = 'smem constant byte address 0x4 - core index']
  #allocation1 [shape = 'u32[144,128]{1,0:T(1,128)}', space=vmem, size = 0x12000, scoped, tag = 'internal scratch']
  %s0 = inlined_call_operand.vmem [shape: f32[1,32], index: 0, kind: input, shape index: {}]
  %s1 = inlined_call_operand.hbm [shape: bf16[2,32,96], index: 1, kind: input, shape index: {}]
  %s2 = inlined_call_operand.vmem [shape: f32[2,4,32], index: 2, kind: input, shape index: {}]
  %s3 = inlined_call_operand.vmem [shape: f32[2,1,32], index: 3, kind: output, shape index: {}]
  %s4 = sld [smem:[#allocation0]]
  $region26: #{encoder_forward.1} parent=0
    _
  %s6 = ssub.s32 1, %s4
  %s7 = scalar_select 0, %s6, %s4
  $region1: #{encoder_forward.1} parent=0
    #allocation2 [shape = 'u8[16384]{0}', space=vmem, size = 0x4000, scoped, tag = 'input window, operand 1, single buffered']
    #allocation3 [shape = 's32[1]{0}', space=sflag, size = 0x4, scoped, tag = 'scoped memory for encoder_forward.1']
    %8 = vsyncpa [#allocation3], 0
    // Predicated region
    $region2: #{encoder_forward.1} parent=1 // pred_check
      _
    $region3: #{encoder_forward.1} parent=1 // pred_check_branch
      %10 = sbr.rel (0) target = $region5
    $region4: #{encoder_forward.1} parent=1 // pred_region
      _
    $region5: #{encoder_forward.1} parent=1 // pred_fallthru
      _
    // Predicated region
    $region6: #{encoder_forward.1} parent=1 // pred_check
      _
    $region7: #{encoder_forward.1} parent=1 // pred_check_branch
      %12 = sbr.rel (0) target = $region9
    $region8: #{encoder_forward.1} parent=1 // pred_region
      %s14 = ssub.s32 512, 512
      %15 = vsyncadd [#allocation3], %s14
      %s16 = sshll.u32 [#allocation2], 4
      %s17 = int_to_ptr.vmem [resolvable:$true] %s16
      %22 = dma.hbm_to_vmem [thread:$0]  %s1, 512, %s17, [#allocation3], 64, 64, 4
    $region9: #{encoder_forward.1} parent=1 // pred_fallthru
      _
    // Predicated region
    $region10: #{encoder_forward.1} parent=1 // pred_check
      _
    $region11: #{encoder_forward.1} parent=1 // pred_check_branch
      %24 = sbr.rel (0) target = $region13
    $region12: #{encoder_forward.1} parent=1 // pred_region
      _
    $region13: #{encoder_forward.1} parent=1 // pred_fallthru
      _
    // Predicated region
    $region14: #{encoder_forward.1} parent=1 // pred_check
      _
    $region15: #{encoder_forward.1} parent=1 // pred_check_branch
      %26 = sbr.rel (0) target = $region17
    $region16: #{encoder_forward.1} parent=1 // pred_region
      %27 = dma.done [#allocation3], 512
    $region17: #{encoder_forward.1} parent=1 // pred_fallthru
      _
    %v29 = vld [vmem:[%s0] sm:$0x1]
    %v30 = vpack.c.bf16 %v29, %v29
    %v31 = vld [vmem:[#allocation2] sm:$0xf]
    %v32 = vld [vmem:[#allocation2 + $0x4] sm:$0xf]
    %v33 = vld [vmem:[#allocation2 + $0x8] sm:$0xf]
    %v34 = vld [vmem:[#allocation2 + $0xc] sm:$0xf]
    %v39 = vunpack.c.l.b16 %v31
    %v40 = vunpack.c.l.b16 %v32
    %v41 = vunpack.c.l.b16 %v33
    %v42 = vunpack.c.l.b16 %v34
    %v43 = vpack.c.b16 %v40, %v39
    %v44 = vpack.c.b16 %v42, %v41
    %vm47 = vcmask 261120
    %v49 = vsel %vm47, %v30, 0
    %51 = vmatprep.subr.bf16.mxu0 0
    %52 = vmatpush1.bf16.msra.mxu0 %v43
    %53 = vmatprep.subr.bf16.mxu0 0
    %54 = vmatpush1.bf16.msra.mxu0 %v44
    %55 = vmatprep.subr.bf16.mxu0 0
    %56 = vmatpush1.bf16.msra.mxu0 0
    %57 = vmatprep.subr.bf16.mxu0 0
    %58 = vmatpush1.bf16.msra.mxu0 0
    %59 = vmatprep.subr.bf16.mxu0 0
    %60 = vmatpush1.bf16.msra.mxu0 0
    %61 = vmatprep.subr.bf16.mxu0 0
    %62 = vmatpush1.bf16.msra.mxu0 0
    %63 = vmatprep.subr.bf16.mxu0 0
    %64 = vmatpush1.bf16.msra.mxu0 0
    %65 = vmatprep.subr.bf16.mxu0 0
    %66 = vmatpush1.bf16.msra.mxu0 0
    %67 = vmatprep.subr.bf16.mxu0 0
    %68 = vmatpush1.bf16.msra.mxu0 0
    %69 = vmatprep.subr.bf16.mxu0 0
    %70 = vmatpush1.bf16.msra.mxu0 0
    %71 = vmatprep.subr.bf16.mxu0 0
    %72 = vmatpush1.bf16.msra.mxu0 0
    %73 = vmatprep.subr.bf16.mxu0 0
    %74 = vmatpush1.bf16.msra.mxu0 0
    %75 = vmatprep.subr.bf16.mxu0 0
    %76 = vmatpush1.bf16.msra.mxu0 0
    %77 = vmatprep.subr.bf16.mxu0 0
    %78 = vmatpush1.bf16.msra.mxu0 0
    %79 = vmatprep.subr.bf16.mxu0 0
    %80 = vmatpush1.bf16.msra.mxu0 0
    %81 = vmatprep.subr.bf16.mxu0 0
    %82 = vmatpush1.bf16.msra.mxu0 0
    %83 = vmatprep.mubr.bf16.mxu0 0
    %84 = vmatmul.mubr.bf16.gmra.mrb[0].mxu0 %v49
    %v85 = vpop.f32.mrb[0].mxu0
    %v86 = vadd.f32 0.0, %v85
    %v87 = vpop.f32.mrb[0].mxu0
    %v88 = vpop.f32.mrb[0].mxu0
    %v89 = vpop.f32.mrb[0].mxu0
    %90 = vdwg.mxu0
    %v91 = vld [vmem:[%s2] sm:$0xf]
    %v92 = vadd.f32 %v86, %v91
    %v93 = vxor.u32 %v92, 2147483648
    %v94 = vmul.f32 %v93, 1.442695
    %v95 = vpow.pop %v94
    %v96 = vadd.f32 %v95, 1.0
    %v97 = vrcp.pop %v96
    %v98 = vmul.f32 1.0, %v97
    %v100 = vrot.slane %v91, 1
    %101 = vrot.lane.b32.xlu0 %v100, 32
    %v102 = vpop.permute.xlu0 %101
    %v104 = vadd.f32 %v86, %v102
    %v105 = vxor.u32 %v104, 2147483648
    %v106 = vmul.f32 %v105, 1.442695
    %v107 = vpow.pop %v106
    %v108 = vadd.f32 %v107, 1.0
    %v109 = vrcp.pop %v108
    %v110 = vmul.f32 1.0, %v109
    %v111 = vrot.slane %v91, 2
    %112 = vrot.lane.b32.xlu0 %v111, 64
    %v113 = vpop.permute.xlu0 %112
    %v115 = vadd.f32 %v86, %v113
    %v116 = vrot.slane %v91, 3
    %v118 = vmul.f32 %v98, %v116
    %120 = vrot.lane.b32.xlu0 %v118, 64
    %v121 = vpop.permute.xlu0 %120
    %v123 = vadd.f32 %v115, %v121
    %v124 = vtanh.pop %v123
    %v125 = vsub.f32 1.0, %v110
    %127 = vrot.lane.b32.xlu0 %v124, 96
    %v128 = vpop.permute.xlu0 %127
    %v130 = vmul.f32 %v125, %v128
    %132 = vrot.lane.b32.xlu0 %v130, 96
    %v133 = vpop.permute.xlu0 %132
    %vm135 = vcmask 253952
    %136 = vst.msk [vmem:[%s3] sm:$0x1] %vm135, %v133
    %v137 = vpack.c.bf16 %v130, %v130
    %s138 = scalar_lea.vmem [#allocation2], 16
    %v139 = vld [vmem:[%s138] sm:$0xf]
    %v140 = vld [vmem:[%s138 + $0x4] sm:$0xf]
    %v141 = vld [vmem:[%s138 + $0x8] sm:$0xf]
    %v142 = vld [vmem:[%s138 + $0xc] sm:$0xf]
    %144 = vrot.lane.b32.xlu0 %v137, 96
    %v145 = vpop.permute.xlu0 %144
    %v150 = vunpack.c.l.b16 %v139
    %v151 = vunpack.c.l.b16 %v140
    %v152 = vunpack.c.l.b16 %v141
    %v153 = vunpack.c.l.b16 %v142
    %v154 = vpack.c.b16 %v151, %v150
    %v155 = vpack.c.b16 %v153, %v152
    %v159 = vsel %vm47, %v145, 0
    %161 = vmatprep.subr.bf16.mxu0 0
    %162 = vmatpush1.bf16.msra.mxu0 %v154
    %163 = vmatprep.subr.bf16.mxu0 0
    %164 = vmatpush1.bf16.msra.mxu0 %v155
    %165 = vmatprep.subr.bf16.mxu0 0
    %166 = vmatpush1.bf16.msra.mxu0 0
    %167 = vmatprep.subr.bf16.mxu0 0
    %168 = vmatpush1.bf16.msra.mxu0 0
    %169 = vmatprep.subr.bf16.mxu0 0
    %170 = vmatpush1.bf16.msra.mxu0 0
    %171 = vmatprep.subr.bf16.mxu0 0
    %172 = vmatpush1.bf16.msra.mxu0 0
    %173 = vmatprep.subr.bf16.mxu0 0
    %174 = vmatpush1.bf16.msra.mxu0 0
    %175 = vmatprep.subr.bf16.mxu0 0
    %176 = vmatpush1.bf16.msra.mxu0 0
    %177 = vmatprep.subr.bf16.mxu0 0
    %178 = vmatpush1.bf16.msra.mxu0 0
    %179 = vmatprep.subr.bf16.mxu0 0
    %180 = vmatpush1.bf16.msra.mxu0 0
    %181 = vmatprep.subr.bf16.mxu0 0
    %182 = vmatpush1.bf16.msra.mxu0 0
    %183 = vmatprep.subr.bf16.mxu0 0
    %184 = vmatpush1.bf16.msra.mxu0 0
    %185 = vmatprep.subr.bf16.mxu0 0
    %186 = vmatpush1.bf16.msra.mxu0 0
    %187 = vmatprep.subr.bf16.mxu0 0
    %188 = vmatpush1.bf16.msra.mxu0 0
    %189 = vmatprep.subr.bf16.mxu0 0
    %190 = vmatpush1.bf16.msra.mxu0 0
    %191 = vmatprep.subr.bf16.mxu0 0
    %192 = vmatpush1.bf16.msra.mxu0 0
    %193 = vmatprep.mubr.bf16.mxu0 0
    %194 = vmatmul.mubr.bf16.gmra.mrb[0].mxu0 %v159
    %v195 = vpop.f32.mrb[0].mxu0
    %v196 = vadd.f32 0.0, %v195
    %v197 = vpop.f32.mrb[0].mxu0
    %v198 = vpop.f32.mrb[0].mxu0
    %v199 = vpop.f32.mrb[0].mxu0
    %200 = vdwg.mxu0
    %s201 = scalar_lea.vmem %s2, 4
    %v202 = vld [vmem:[%s201] sm:$0xf]
    %v203 = vadd.f32 %v196, %v202
    %v204 = vxor.u32 %v203, 2147483648
    %v205 = vmul.f32 %v204, 1.442695
    %v206 = vpow.pop %v205
    %v207 = vadd.f32 %v206, 1.0
    %v208 = vrcp.pop %v207
    %v209 = vmul.f32 1.0, %v208
    %v211 = vrot.slane %v202, 1
    %212 = vrot.lane.b32.xlu0 %v211, 32
    %v213 = vpop.permute.xlu0 %212
    %v215 = vadd.f32 %v196, %v213
    %v216 = vxor.u32 %v215, 2147483648
    %v217 = vmul.f32 %v216, 1.442695
    %v218 = vpow.pop %v217
    %v219 = vadd.f32 %v218, 1.0
    %v220 = vrcp.pop %v219
    %v221 = vmul.f32 1.0, %v220
    %v222 = vrot.slane %v202, 2
    %223 = vrot.lane.b32.xlu0 %v222, 64
    %v224 = vpop.permute.xlu0 %223
    %v226 = vadd.f32 %v196, %v224
    %v227 = vrot.slane %v202, 3
    %v229 = vmul.f32 %v209, %v227
    %231 = vrot.lane.b32.xlu0 %v229, 64
    %v232 = vpop.permute.xlu0 %231
    %v234 = vadd.f32 %v226, %v232
    %v235 = vtanh.pop %v234
    %v236 = vsub.f32 1.0, %v221
    %238 = vrot.lane.b32.xlu0 %v235, 96
    %v239 = vpop.permute.xlu0 %238
    %v241 = vmul.f32 %v236, %v239
    %243 = vrot.lane.b32.xlu0 %v241, 96
    %v244 = vpop.permute.xlu0 %243
    %s246 = scalar_lea.vmem %s3, 1
    %247 = vst.msk [vmem:[%s246] sm:$0x1] %vm135, %v244
    // Predicated region
    $region18: #{encoder_forward.1} parent=1 // pred_check
      _
    $region19: #{encoder_forward.1} parent=1 // pred_check_branch
      %249 = sbr.rel (0) target = $region21
    $region20: #{encoder_forward.1} parent=1 // pred_region
      _
    $region21: #{encoder_forward.1} parent=1 // pred_fallthru
      _
    // Predicated region
    $region22: #{encoder_forward.1} parent=1 // pred_check
      _
    $region23: #{encoder_forward.1} parent=1 // pred_check_branch
      %251 = sbr.rel (0) target = $region25
    $region24: #{encoder_forward.1} parent=1 // pred_region
      _
    $region25: #{encoder_forward.1} parent=1 // pred_fallthru
      _
    %252 = vsyncpa [#allocation3], 1

</llo_original>
